<compile_context>
chip_gen: v7x
topology: tpu7x:2x2x1
jax: 0.10.0
libtpu: 0.0.40
codegen_flags: <defaults>
</compile_context>

<pallas_src>
import jax
import jax.numpy as jnp
from jax.experimental import pallas as pl
from jax.experimental.pallas import tpu as pltpu

_INV_SQRT2 = 0.7071067811865476


def _gelu_exact_f32(h):
    # exact GELU (nn.GELU default, approximate='none'): 0.5*h*(1+erf(h/sqrt(2)))
    return h * (0.5 + 0.5 * jax.lax.erf(h * _INV_SQRT2))


def _mlp_kernel_f32_out(x_ref, w1_ref, b1_ref, w2_ref, b2_ref, o_ref):
    """f32 output: accumulate straight into the resident output tile.
       Grid = (row tiles i 'parallel', hidden tiles j 'arbitrary')."""
    j = pl.program_id(1)

    @pl.when(j == 0)
    def _init():
        o_ref[...] = jnp.zeros_like(o_ref)

    # fc1 partial: cast the resident x tile to bf16 for the MXU, f32 acc.
    h = jnp.dot(x_ref[...].astype(w1_ref.dtype), w1_ref[...],
                preferred_element_type=jnp.float32)
    h = _gelu_exact_f32(h + b1_ref[...])          # bias + exact GELU in f32
    # dropout with p=0.0 is the identity -> nothing to do.

    # fc2 partial accumulate into the resident output tile.
    o_ref[...] += jnp.dot(h.astype(w2_ref.dtype), w2_ref[...],
                          preferred_element_type=jnp.float32)

    @pl.when(j == pl.num_programs(1) - 1)
    def _finalize():
        o_ref[...] += b2_ref[...]


def _mlp_kernel_scratch(x_ref, w1_ref, b1_ref, w2_ref, b2_ref, o_ref, acc_ref):
    """Non-f32 output: f32 VMEM accumulator, cast on the final hidden tile."""
    j = pl.program_id(1)

    @pl.when(j == 0)
    def _init():
        acc_ref[...] = jnp.zeros_like(acc_ref)

    h = jnp.dot(x_ref[...].astype(w1_ref.dtype), w1_ref[...],
                preferred_element_type=jnp.float32)
    h = _gelu_exact_f32(h + b1_ref[...])
    acc_ref[...] += jnp.dot(h.astype(w2_ref.dtype), w2_ref[...],
                            preferred_element_type=jnp.float32)

    @pl.when(j == pl.num_programs(1) - 1)
    def _finalize():
        o_ref[...] = (acc_ref[...] + b2_ref[...]).astype(o_ref.dtype)


def _round_up(x, m):
    return (x + m - 1) // m * m


def _vmem_capacity_bytes():
    try:
        return int(pltpu.get_tpu_info().vmem_capacity_bytes)
    except Exception:
        return 64 * 1024 * 1024  # conservative fallback (v7x per-TC)


def _estimate_vmem(tm, tk, Fin_p, Fout_p, x_it, w_it, out_it, use_scratch):
    est = (2 * tm * Fin_p * x_it          # x tiles (double-buffered)
           + 2 * Fin_p * tk * w_it        # W1 tiles
           + 2 * 8 * tk * 4               # b1 tiles (sublane-padded)
           + 2 * tk * Fout_p * w_it       # W2 tiles
           + 2 * 8 * Fout_p * 4           # b2 tiles
           + 2 * tm * Fout_p * out_it     # output tiles
           + tm * tk * (4 + w_it))        # GELU intermediate (f32 h + bf16 cast)
    if use_scratch:
        est += tm * Fout_p * 4            # f32 accumulator scratch
    return est


def mlp_pallas(x, w1, b1, w2, b2, *, tm=None, tk=None, weight_dtype=jnp.bfloat16):
    """x: [B, S, in]; w1: [in, hidden]; b1: [hidden]; w2: [hidden, out]; b2: [out]."""
    B, S, Fin = x.shape
    Hid = w1.shape[1]
    Fout = w2.shape[1]
    M = B * S
    out_dtype = x.dtype
    use_scratch = out_dtype != jnp.float32

    Fin_p = _round_up(Fin, 128)
    Fout_p = _round_up(Fout, 128)

    # Generation-aware tile defaults: 128 MiB VMEM parts (v5e/v6e) take the
    # big tiles; 64 MiB (v7x per-TC) takes 512/512 so double-buffering survives.
    vmem_cap = _vmem_capacity_bytes()
    big_vmem = vmem_cap >= 100 * 1024 * 1024
    if tm is None:
        tm = 1024 if big_vmem else 512
    if tk is None:
        tk = 1024 if big_vmem else 512

    # Clamp to problem size; keep row tile a multiple of 16 (covers bf16
    # sublane packing) and the hidden tile lane-dense (multiple of 128).
    tm = max(16, min(_round_up(tm, 16), _round_up(M, 16)))
    tk = max(128, min(_round_up(tk, 128), _round_up(Hid, 128)))

    x_it = jnp.dtype(x.dtype).itemsize
    w_it = jnp.dtype(weight_dtype).itemsize
    out_it = jnp.dtype(out_dtype).itemsize

    # Shrink tiles until the double-buffered footprint fits comfortably.
    budget = int(0.55 * vmem_cap)
    while (_estimate_vmem(tm, tk, Fin_p, Fout_p, x_it, w_it, out_it, use_scratch)
           > budget and tk > 128):
        tk = max(128, _round_up(tk // 2, 128))
    while (_estimate_vmem(tm, tk, Fin_p, Fout_p, x_it, w_it, out_it, use_scratch)
           > budget and tm > 16):
        tm = max(16, _round_up(tm // 2, 16))

    Mp = _round_up(M, tm)
    Hid_p = _round_up(Hid, tk)

    # Zero-pad to lane/tile-aligned shapes.  gelu(0 + 0) == 0 so padded
    # Fin/hidden columns contribute exactly nothing; padded rows are sliced
    # off at the end.  x keeps its native dtype (cast happens in-kernel on the
    # resident tile).  Weights are cast to bf16 once per call; in production
    # the padded/cast weights should be prepared once and cached.
    x2d = jnp.pad(x.reshape(M, Fin), ((0, Mp - M), (0, Fin_p - Fin)))
    w1p = jnp.pad(w1, ((0, Fin_p - Fin), (0, Hid_p - Hid))).astype(weight_dtype)
    w2p = jnp.pad(w2, ((0, Hid_p - Hid), (0, Fout_p - Fout))).astype(weight_dtype)
    b1p = jnp.pad(b1, (0, Hid_p - Hid)).astype(jnp.float32).reshape(1, Hid_p)
    b2p = jnp.pad(b2, (0, Fout_p - Fout)).astype(jnp.float32).reshape(1, Fout_p)

    grid = (Mp // tm, Hid_p // tk)

    est = _estimate_vmem(tm, tk, Fin_p, Fout_p, x_it, w_it, out_it, use_scratch)
    vmem_limit = min(int(0.9 * vmem_cap), max(32 * 1024 * 1024, int(1.3 * est)))

    kernel = _mlp_kernel_scratch if use_scratch else _mlp_kernel_f32_out
    scratch_shapes = ([pltpu.VMEM((tm, Fout_p), jnp.float32)]
                      if use_scratch else [])

    out2d = pl.pallas_call(
        kernel,
        out_shape=jax.ShapeDtypeStruct((Mp, Fout_p), out_dtype),
        grid_spec=pltpu.PrefetchScalarGridSpec(
            num_scalar_prefetch=0,
            grid=grid,
            in_specs=[
                pl.BlockSpec((tm, Fin_p), lambda i, j: (i, 0)),    # x row tile (resident over j)
                pl.BlockSpec((Fin_p, tk), lambda i, j: (0, j)),    # W1 hidden tile
                pl.BlockSpec((1, tk), lambda i, j: (0, j)),        # b1 hidden tile
                pl.BlockSpec((tk, Fout_p), lambda i, j: (j, 0)),   # W2 hidden tile
                pl.BlockSpec((1, Fout_p), lambda i, j: (0, 0)),    # b2 (constant)
            ],
            out_specs=pl.BlockSpec((tm, Fout_p), lambda i, j: (i, 0)),
            scratch_shapes=scratch_shapes,
        ),
        compiler_params=pltpu.CompilerParams(
            dimension_semantics=("parallel", "arbitrary"),
            vmem_limit_bytes=vmem_limit,
        ),
    )(x2d, w1p, b1p, w2p, b2p)

    return out2d[:M, :Fout].reshape(B, S, Fout)


# ---------------------------------------------------------------------------
# Reference (pure JAX, f32) for testing
# ---------------------------------------------------------------------------
def _reference_f32(x, w1, b1, w2, b2):
    h = _gelu_exact_f32(x @ w1 + b1)
    return h @ w2 + b2


if __name__ == "__main__":
    key = jax.random.PRNGKey(0)

    def run_case(B, S, Fin, Hid, Fout, dtype=jnp.float32, atol=3e-2, **tile_kw):
        ks = jax.random.split(key, 5)
        x = jax.random.normal(ks[0], (B, S, Fin), jnp.float32)
        w1 = jax.random.normal(ks[1], (Fin, Hid), jnp.float32) * 0.05
        b1 = jax.random.normal(ks[2], (Hid,), jnp.float32) * 0.05
        w2 = jax.random.normal(ks[3], (Hid, Fout), jnp.float32) * 0.05
        b2 = jax.random.normal(ks[4], (Fout,), jnp.float32) * 0.05

        out = jax.block_until_ready(
            mlp_pallas(x.astype(dtype), w1, b1, w2, b2, **tile_kw))
        assert out.shape == (B, S, Fout)
        assert out.dtype == dtype

        ref = _reference_f32(x, w1, b1, w2, b2)
        err = float(jnp.max(jnp.abs(out.astype(jnp.float32) - ref)))
        assert err < atol, (
            f"max abs err {err} for shape {(B, S, Fin, Hid, Fout)} dtype {dtype}")

    # Case 1: shapes implied by the module (B=2, S=8, in=32, hidden=64, out=32),
    # auto tile selection, f32 accumulate-in-output path.
    run_case(2, 8, 32, 64, 32)

    # Case 2: multi-tile grid (2 row tiles x 3 hidden tiles), accumulator
    # init/finalize across the 'arbitrary' hidden axis, feature-dim padding.
    run_case(2, 128, 48, 320, 80, tm=128, tk=128)

    # Case 3: bf16 input/output exercises the scratch-accumulator path.
    run_case(1, 16, 32, 64, 32, dtype=jnp.bfloat16, atol=5e-2)

    # TODO(synk): dropout with p > 0 would need pltpu.prng_seed/prng_random_bits
    # masking; the module's drop=0.0 makes it the identity so it is omitted.
    print("KERNEL_OK")
</pallas_src>

<mosaic_0001>
module attributes {stable_mosaic.version = 11 : i64} {
  func.func @_mlp_kernel_f32_out(%arg0: i32, %arg1: i32, %arg2: memref<16x128xf32, #tpu.memory_space<vmem>>, %arg3: memref<128x128xbf16, #tpu.memory_space<vmem>>, %arg4: memref<1x128xf32, #tpu.memory_space<vmem>>, %arg5: memref<128x128xbf16, #tpu.memory_space<vmem>>, %arg6: memref<1x128xf32, #tpu.memory_space<vmem>>, %arg7: memref<16x128xf32, #tpu.memory_space<vmem>>) attributes {dimension_semantics = [#tpu.dimension_semantics<parallel>, #tpu.dimension_semantics<arbitrary>], iteration_bounds = array<i64: 1, 1>, scalar_prefetch = 0 : i64, scratch_operands = 0 : i64, tpu.core_type = #tpu.core_type<tc>, window_params = [{transform_indices = @transform_0, window_bounds = array<i64: 16, 128>}, {transform_indices = @transform_1, window_bounds = array<i64: 128, 128>}, {transform_indices = @transform_2, window_bounds = array<i64: 1, 128>}, {transform_indices = @transform_3, window_bounds = array<i64: 128, 128>}, {pipeline_mode = #tpu.pipeline_mode<synchronous>, transform_indices = @transform_4, window_bounds = array<i64: 1, 128>}, {transform_indices = @transform_5, window_bounds = array<i64: 16, 128>}]} {
    %c0_i32 = arith.constant 0 : i32
    %0 = arith.cmpi eq, %arg1, %c0_i32 : i32
    %1 = arith.extui %0 : i1 to i32
    %c0_i32_0 = arith.constant 0 : i32
    %2 = arith.cmpi ne, %1, %c0_i32_0 : i32
    scf.if %2 {
      %cst_18 = arith.constant 0.000000e+00 : f32
      %27 = vector.broadcast %cst_18 : f32 to vector<16x128xf32>
      %c0_19 = arith.constant 0 : index
      %c0_20 = arith.constant 0 : index
      %28 = vector.load %arg7[%c0_19, %c0_20] : memref<16x128xf32, #tpu.memory_space<vmem>>, vector<16x128xf32>
      tpu.vector_store %arg7[%c0_19, %c0_20], %27 {strides = array<i32>} : memref<16x128xf32, #tpu.memory_space<vmem>>, vector<16x128xf32>,
    } else {
    }
    %c0 = arith.constant 0 : index
    %c0_1 = arith.constant 0 : index
    %3 = vector.load %arg2[%c0, %c0_1] : memref<16x128xf32, #tpu.memory_space<vmem>>, vector<16x128xf32>
    %4 = arith.truncf %3 : vector<16x128xf32> to vector<16x128xbf16>
    %c0_2 = arith.constant 0 : index
    %c0_3 = arith.constant 0 : index
    %5 = vector.load %arg3[%c0_2, %c0_3] : memref<128x128xbf16, #tpu.memory_space<vmem>>, vector<128x128xbf16>
    %cst = arith.constant dense<0.000000e+00> : vector<16x128xf32>
    %6 = tpu.matmul %4, %5, %cst {dimension_numbers = #tpu.dot_dimension_numbers<[1], [0], [0], [1], [0, 0, 1, 1], [], []>} : vector<16x128xbf16>, vector<128x128xbf16>, vector<16x128xf32> -> vector<16x128xf32>
    %c0_4 = arith.constant 0 : index
    %c0_5 = arith.constant 0 : index
    %7 = vector.load %arg4[%c0_4, %c0_5] : memref<1x128xf32, #tpu.memory_space<vmem>>, vector<1x128xf32>
    %8 = vector.broadcast %7 : vector<1x128xf32> to vector<16x128xf32>
    %9 = arith.addf %6, %8 : vector<16x128xf32>
    %cst_6 = arith.constant 0.707106769 : f32
    %10 = vector.broadcast %cst_6 : f32 to vector<16x128xf32>
    %11 = arith.mulf %9, %10 : vector<16x128xf32>
    %12 = math.erf %11 : vector<16x128xf32>
    %cst_7 = arith.constant 5.000000e-01 : f32
    %13 = vector.broadcast %cst_7 : f32 to vector<16x128xf32>
    %14 = arith.mulf %13, %12 : vector<16x128xf32>
    %cst_8 = arith.constant 5.000000e-01 : f32
    %15 = vector.broadcast %cst_8 : f32 to vector<16x128xf32>
    %16 = arith.addf %15, %14 : vector<16x128xf32>
    %17 = arith.mulf %9, %16 : vector<16x128xf32>
    %c0_9 = arith.constant 0 : index
    %c0_10 = arith.constant 0 : index
    %18 = vector.load %arg7[%c0_9, %c0_10] : memref<16x128xf32, #tpu.memory_space<vmem>>, vector<16x128xf32>
    %19 = arith.truncf %17 : vector<16x128xf32> to vector<16x128xbf16>
    %c0_11 = arith.constant 0 : index
    %c0_12 = arith.constant 0 : index
    %20 = vector.load %arg5[%c0_11, %c0_12] : memref<128x128xbf16, #tpu.memory_space<vmem>>, vector<128x128xbf16>
    %cst_13 = arith.constant dense<0.000000e+00> : vector<16x128xf32>
    %21 = tpu.matmul %19, %20, %cst_13 {dimension_numbers = #tpu.dot_dimension_numbers<[1], [0], [0], [1], [0, 0, 1, 1], [], []>} : vector<16x128xbf16>, vector<128x128xbf16>, vector<16x128xf32> -> vector<16x128xf32>
    %22 = arith.addf %18, %21 : vector<16x128xf32>
    %c0_14 = arith.constant 0 : index
    %c0_15 = arith.constant 0 : index
    %23 = vector.load %arg7[%c0_14, %c0_15] : memref<16x128xf32, #tpu.memory_space<vmem>>, vector<16x128xf32>
    tpu.vector_store %arg7[%c0_14, %c0_15], %22 {strides = array<i32>} : memref<16x128xf32, #tpu.memory_space<vmem>>, vector<16x128xf32>,
    %c0_i32_16 = arith.constant 0 : i32
    %24 = arith.cmpi eq, %arg1, %c0_i32_16 : i32
    %25 = arith.extui %24 : i1 to i32
    %c0_i32_17 = arith.constant 0 : i32
    %26 = arith.cmpi ne, %25, %c0_i32_17 : i32
    scf.if %26 {
      %c0_18 = arith.constant 0 : index
      %c0_19 = arith.constant 0 : index
      %27 = vector.load %arg7[%c0_18, %c0_19] : memref<16x128xf32, #tpu.memory_space<vmem>>, vector<16x128xf32>
      %c0_20 = arith.constant 0 : index
      %c0_21 = arith.constant 0 : index
      %28 = vector.load %arg6[%c0_20, %c0_21] : memref<1x128xf32, #tpu.memory_space<vmem>>, vector<1x128xf32>
      %29 = vector.broadcast %28 : vector<1x128xf32> to vector<16x128xf32>
      %30 = arith.addf %27, %29 : vector<16x128xf32>
      %c0_22 = arith.constant 0 : index
      %c0_23 = arith.constant 0 : index
      %31 = vector.load %arg7[%c0_22, %c0_23] : memref<16x128xf32, #tpu.memory_space<vmem>>, vector<16x128xf32>
      tpu.vector_store %arg7[%c0_22, %c0_23], %30 {strides = array<i32>} : memref<16x128xf32, #tpu.memory_space<vmem>>, vector<16x128xf32>,
    } else {
    }
    return
  }
  func.func @transform_0(%arg0: i32, %arg1: i32) -> (i32, i32) {
    %c0_i32 = arith.constant 0 : i32
    %c0_i32_0 = arith.constant 0 : i32
    return %arg0, %c0_i32 : i32, i32
  }
  func.func @transform_1(%arg0: i32, %arg1: i32) -> (i32, i32) {
    %c0_i32 = arith.constant 0 : i32
    %c0_i32_0 = arith.constant 0 : i32
    return %c0_i32, %arg1 : i32, i32
  }
  func.func @transform_2(%arg0: i32, %arg1: i32) -> (i32, i32) {
    %c0_i32 = arith.constant 0 : i32
    %c0_i32_0 = arith.constant 0 : i32
    return %c0_i32, %arg1 : i32, i32
  }
  func.func @transform_3(%arg0: i32, %arg1: i32) -> (i32, i32) {
    %c0_i32 = arith.constant 0 : i32
    %c0_i32_0 = arith.constant 0 : i32
    return %arg1, %c0_i32 : i32, i32
  }
  func.func @transform_4(%arg0: i32, %arg1: i32) -> (i32, i32) {
    %c0_i32 = arith.constant 0 : i32
    %c0_i32_0 = arith.constant 0 : i32
    %c0_i32_1 = arith.constant 0 : i32
    return %c0_i32, %c0_i32_0 : i32, i32
  }
  func.func @transform_5(%arg0: i32, %arg1: i32) -> (i32, i32) {
    %c0_i32 = arith.constant 0 : i32
    %c0_i32_0 = arith.constant 0 : i32
    return %arg0, %c0_i32 : i32, i32
  }
}

</mosaic_0001>

<llo_original>
// kernel: tpu_custom_call.1
$region0: #{tpu_custom_call.1}
  #allocation0 [shape = 'u32[]', space=smem, size = 0x4, offset = 0x4, fixed_abs, tag = 'smem constant byte address 0x4 - core index']
  #allocation1 [shape = 'u32[144,128]{1,0:T(1,128)}', space=vmem, size = 0x12000, scoped, tag = 'internal scratch']
  %s0 = inlined_call_operand.hbm [shape: f32[16,128], index: 0, kind: input, shape index: {}]
  %s1 = inlined_call_operand.hbm [shape: bf16[128,128], index: 1, kind: input, shape index: {}]
  %s2 = inlined_call_operand.vmem [shape: f32[1,128], index: 2, kind: input, shape index: {}]
  %s3 = inlined_call_operand.hbm [shape: bf16[128,128], index: 3, kind: input, shape index: {}]
  %s4 = inlined_call_operand.vmem [shape: f32[1,128], index: 4, kind: input, shape index: {}]
  %s5 = inlined_call_operand.hbm [shape: f32[16,128], index: 5, kind: output, shape index: {}]
  %s6 = sld [smem:[#allocation0]]
  $region50: #{tpu_custom_call.1} parent=0
    _
  %s8 = ssub.s32 1, %s6
  %s9 = scalar_select 0, %s8, %s6
  $region1: #{tpu_custom_call.1} parent=0
    #allocation2 [shape = 'u8[8192]{0}', space=vmem, size = 0x2000, scoped, tag = 'input window, operand 0, single buffered']
    #allocation3 [shape = 's32[1]{0}', space=sflag, size = 0x4, scoped, tag = 'scoped memory for tpu_custom_call.1']
    #allocation4 [shape = 's32[1]{0}', space=sflag, size = 0x4, scoped, tag = 'scoped memory for tpu_custom_call.1']
    #allocation5 [shape = 'u8[32768]{0}', space=vmem, size = 0x8000, scoped, tag = 'input window, operand 1, single buffered']
    #allocation6 [shape = 's32[1]{0}', space=sflag, size = 0x4, scoped, tag = 'scoped memory for tpu_custom_call.1']
    #allocation7 [shape = 'u8[32768]{0}', space=vmem, size = 0x8000, scoped, tag = 'input window, operand 3, single buffered']
    #allocation8 [shape = 'u8[8192]{0}', space=vmem, size = 0x2000, scoped, tag = 'output window, operand 0, single buffered']
    %10 = vsyncpa [#allocation3], 0
    %11 = vsyncpa [#allocation6], 0
    %12 = vsyncpa [#allocation4], 0
    // Predicated region
    $region2: #{tpu_custom_call.1} parent=1 // pred_check
      _
    $region3: #{tpu_custom_call.1} parent=1 // pred_check_branch
      %14 = sbr.rel (0) target = $region5
    $region4: #{tpu_custom_call.1} parent=1 // pred_region
      %s16 = ssub.s32 256, 256
      %17 = vsyncadd [#allocation3], %s16
      %s18 = sshll.u32 [#allocation2], 4
      %s19 = int_to_ptr.vmem [resolvable:$true] %s18
      %24 = dma.hbm_to_vmem [thread:$0]  %s0, 256, %s19, [#allocation3], 128, 128, 8
    $region5: #{tpu_custom_call.1} parent=1 // pred_fallthru
      _
    // Predicated region
    $region6: #{tpu_custom_call.1} parent=1 // pred_check
      _
    $region7: #{tpu_custom_call.1} parent=1 // pred_check_branch
      %26 = sbr.rel (0) target = $region9
    $region8: #{tpu_custom_call.1} parent=1 // pred_region
      %s28 = ssub.s32 1024, 1024
      %29 = vsyncadd [#allocation6], %s28
      %s30 = sshll.u32 [#allocation5], 4
      %s31 = int_to_ptr.vmem [resolvable:$true] %s30
      %36 = dma.hbm_to_vmem [thread:$0]  %s1, 1024, %s31, [#allocation6], 64, 64, 4
    $region9: #{tpu_custom_call.1} parent=1 // pred_fallthru
      _
    // Predicated region
    $region10: #{tpu_custom_call.1} parent=1 // pred_check
      _
    $region11: #{tpu_custom_call.1} parent=1 // pred_check_branch
      %38 = sbr.rel (0) target = $region13
    $region12: #{tpu_custom_call.1} parent=1 // pred_region
      _
    $region13: #{tpu_custom_call.1} parent=1 // pred_fallthru
      _
    // Predicated region
    $region14: #{tpu_custom_call.1} parent=1 // pred_check
      _
    $region15: #{tpu_custom_call.1} parent=1 // pred_check_branch
      %40 = sbr.rel (0) target = $region17
    $region16: #{tpu_custom_call.1} parent=1 // pred_region
      %s42 = ssub.s32 1024, 1024
      %43 = vsyncadd [#allocation6], %s42
      %s44 = sshll.u32 [#allocation7], 4
      %s45 = int_to_ptr.vmem [resolvable:$true] %s44
      %50 = dma.hbm_to_vmem [thread:$0]  %s3, 1024, %s45, [#allocation6], 64, 64, 4
    $region17: #{tpu_custom_call.1} parent=1 // pred_fallthru
      _
    // Predicated region
    $region18: #{tpu_custom_call.1} parent=1 // pred_check
      _
    $region19: #{tpu_custom_call.1} parent=1 // pred_check_branch
      %52 = sbr.rel (0) target = $region21
    $region20: #{tpu_custom_call.1} parent=1 // pred_region
      _
    $region21: #{tpu_custom_call.1} parent=1 // pred_fallthru
      _
    // Predicated region
    $region22: #{tpu_custom_call.1} parent=1 // pred_check
      _
    $region23: #{tpu_custom_call.1} parent=1 // pred_check_branch
      %54 = sbr.rel (0) target = $region25
    $region24: #{tpu_custom_call.1} parent=1 // pred_region
      %55 = dma.done [#allocation3], 256
    $region25: #{tpu_custom_call.1} parent=1 // pred_fallthru
      _
    // Predicated region
    $region26: #{tpu_custom_call.1} parent=1 // pred_check
      _
    $region27: #{tpu_custom_call.1} parent=1 // pred_check_branch
      %57 = sbr.rel (0) target = $region29
    $region28: #{tpu_custom_call.1} parent=1 // pred_region
      %58 = dma.done [#allocation6], 1024
    $region29: #{tpu_custom_call.1} parent=1 // pred_fallthru
      _
    // Predicated region
    $region30: #{tpu_custom_call.1} parent=1 // pred_check
      _
    $region31: #{tpu_custom_call.1} parent=1 // pred_check_branch
      %60 = sbr.rel (0) target = $region33
    $region32: #{tpu_custom_call.1} parent=1 // pred_region
      %61 = dma.done [#allocation6], 1024
    $region33: #{tpu_custom_call.1} parent=1 // pred_fallthru
      _
    %p63 = scmp.eq.s32.totalorder 0, 0
    // Predicated region
    $region34: #{tpu_custom_call.1} parent=1 // pred_check
      %p64 = pneg %p63
    $region35: #{tpu_custom_call.1} parent=1 // pred_check_branch
      %66 = sbr.rel (%p64) target = $region37
    $region36: #{tpu_custom_call.1} parent=1 // pred_region
      %67 = vst [vmem:[#allocation8] sm:$0xff] 0.0
      %68 = vst [vmem:[#allocation8 + $0x8] sm:$0xff] 0.0
    $region37: #{tpu_custom_call.1} parent=1 // pred_fallthru
      _
    %v69 = vld [vmem:[#allocation2] sm:$0xff]
    %v70 = vld [vmem:[#allocation2 + $0x8] sm:$0xff]
    %v71 = vpack.c.bf16 %v70, %v69
    %v72 = vld [vmem:[#allocation5] sm:$0xf]
    %v73 = vld [vmem:[#allocation5 + $0x4] sm:$0xf]
    %v74 = vld [vmem:[#allocation5 + $0x8] sm:$0xf]
    %v75 = vld [vmem:[#allocation5 + $0xc] sm:$0xf]
    %v76 = vld [vmem:[#allocation5 + $0x10] sm:$0xf]
    %v77 = vld [vmem:[#allocation5 + $0x14] sm:$0xf]
    %v78 = vld [vmem:[#allocation5 + $0x18] sm:$0xf]
    %v79 = vld [vmem:[#allocation5 + $0x1c] sm:$0xf]
    %v80 = vld [vmem:[#allocation5 + $0x20] sm:$0xf]
    %v81 = vld [vmem:[#allocation5 + $0x24] sm:$0xf]
    %v82 = vld [vmem:[#allocation5 + $0x28] sm:$0xf]
    %v83 = vld [vmem:[#allocation5 + $0x2c] sm:$0xf]
    %v84 = vld [vmem:[#allocation5 + $0x30] sm:$0xf]
    %v85 = vld [vmem:[#allocation5 + $0x34] sm:$0xf]
    %v86 = vld [vmem:[#allocation5 + $0x38] sm:$0xf]
    %v87 = vld [vmem:[#allocation5 + $0x3c] sm:$0xf]
    %v88 = vld [vmem:[%s2] sm:$0x1]
    %v90 = vlaneseq
    %v91 = vshrl.u32 %v90, 7
    %v92 = vsub.s32 0, %v91
    %v93 = vrot.slane %v88, %v92
    %v111 = vunpack.c.l.b16 %v72
    %v112 = vunpack.c.l.b16 %v73
    %v113 = vunpack.c.l.b16 %v74
    %v114 = vunpack.c.l.b16 %v75
    %v115 = vunpack.c.l.b16 %v76
    %v116 = vunpack.c.l.b16 %v77
    %v117 = vunpack.c.l.b16 %v78
    %v118 = vunpack.c.l.b16 %v79
    %v119 = vunpack.c.l.b16 %v80
    %v120 = vunpack.c.l.b16 %v81
    %v121 = vunpack.c.l.b16 %v82
    %v122 = vunpack.c.l.b16 %v83
    %v123 = vunpack.c.l.b16 %v84
    %v124 = vunpack.c.l.b16 %v85
    %v125 = vunpack.c.l.b16 %v86
    %v126 = vunpack.c.l.b16 %v87
    %v127 = vpack.c.b16 %v112, %v111
    %v128 = vpack.c.b16 %v114, %v113
    %v129 = vpack.c.b16 %v116, %v115
    %v130 = vpack.c.b16 %v118, %v117
    %v131 = vpack.c.b16 %v120, %v119
    %v132 = vpack.c.b16 %v122, %v121
    %v133 = vpack.c.b16 %v124, %v123
    %v134 = vpack.c.b16 %v126, %v125
    %143 = vmatprep.subr.bf16.mxu0 0
    %144 = vmatpush1.bf16.msra.mxu0 %v127
    %145 = vmatprep.subr.bf16.mxu0 0
    %146 = vmatpush1.bf16.msra.mxu0 %v128
    %147 = vmatprep.subr.bf16.mxu0 0
    %148 = vmatpush1.bf16.msra.mxu0 %v129
    %149 = vmatprep.subr.bf16.mxu0 0
    %150 = vmatpush1.bf16.msra.mxu0 %v130
    %151 = vmatprep.subr.bf16.mxu0 0
    %152 = vmatpush1.bf16.msra.mxu0 %v131
    %153 = vmatprep.subr.bf16.mxu0 0
    %154 = vmatpush1.bf16.msra.mxu0 %v132
    %155 = vmatprep.subr.bf16.mxu0 0
    %156 = vmatpush1.bf16.msra.mxu0 %v133
    %157 = vmatprep.subr.bf16.mxu0 0
    %158 = vmatpush1.bf16.msra.mxu0 %v134
    %159 = vmatprep.subr.bf16.mxu0 0
    %160 = vmatpush1.bf16.msra.mxu0 0
    %161 = vmatprep.subr.bf16.mxu0 0
    %162 = vmatpush1.bf16.msra.mxu0 0
    %163 = vmatprep.subr.bf16.mxu0 0
    %164 = vmatpush1.bf16.msra.mxu0 0
    %165 = vmatprep.subr.bf16.mxu0 0
    %166 = vmatpush1.bf16.msra.mxu0 0
    %167 = vmatprep.subr.bf16.mxu0 0
    %168 = vmatpush1.bf16.msra.mxu0 0
    %169 = vmatprep.subr.bf16.mxu0 0
    %170 = vmatpush1.bf16.msra.mxu0 0
    %171 = vmatprep.subr.bf16.mxu0 0
    %172 = vmatpush1.bf16.msra.mxu0 0
    %173 = vmatprep.subr.bf16.mxu0 0
    %174 = vmatpush1.bf16.msra.mxu0 0
    %175 = vmatprep.mubr.bf16.mxu0 0
    %176 = vmatmul.mubr.bf16.gmra.mrb[0].mxu0 %v71
    %v177 = vpop.f32.mrb[0].mxu0
    %v178 = vadd.f32 %v93, %v177
    %v179 = vpop.f32.mrb[0].mxu0
    %v180 = vpop.f32.mrb[0].mxu0
    %v181 = vadd.f32 %v93, %v180
    %v182 = vpop.f32.mrb[0].mxu0
    %183 = vdwg.mxu0
    %v184 = vmul.f32 %v178, 0.70710677
    %v185 = vmul.f32 %v181, 0.70710677
    %v186 = verf.f32.pop %v184
    %v187 = verf.f32.pop %v185
    %v188 = vmul.f32 %v186, 0.5
    %v189 = vmul.f32 %v187, 0.5
    %v190 = vadd.f32 %v188, 0.5
    %v191 = vadd.f32 %v189, 0.5
    %v192 = vmul.f32 %v178, %v190
    %v193 = vmul.f32 %v181, %v191
    %v194 = vld [vmem:[#allocation8] sm:$0xff]
    %v195 = vld [vmem:[#allocation8 + $0x8] sm:$0xff]
    %v196 = vpack.c.bf16 %v193, %v192
    %v197 = vld [vmem:[#allocation7] sm:$0xf]
    %v198 = vld [vmem:[#allocation7 + $0x4] sm:$0xf]
    %v199 = vld [vmem:[#allocation7 + $0x8] sm:$0xf]
    %v200 = vld [vmem:[#allocation7 + $0xc] sm:$0xf]
    %v201 = vld [vmem:[#allocation7 + $0x10] sm:$0xf]
    %v202 = vld [vmem:[#allocation7 + $0x14] sm:$0xf]
    %v203 = vld [vmem:[#allocation7 + $0x18] sm:$0xf]
    %v204 = vld [vmem:[#allocation7 + $0x1c] sm:$0xf]
    %v205 = vld [vmem:[#allocation7 + $0x20] sm:$0xf]
    %v206 = vld [vmem:[#allocation7 + $0x24] sm:$0xf]
    %v207 = vld [vmem:[#allocation7 + $0x28] sm:$0xf]
    %v208 = vld [vmem:[#allocation7 + $0x2c] sm:$0xf]
    %v209 = vld [vmem:[#allocation7 + $0x30] sm:$0xf]
    %v210 = vld [vmem:[#allocation7 + $0x34] sm:$0xf]
    %v211 = vld [vmem:[#allocation7 + $0x38] sm:$0xf]
    %v212 = vld [vmem:[#allocation7 + $0x3c] sm:$0xf]
    %v229 = vunpack.c.l.b16 %v197
    %v230 = vunpack.c.l.b16 %v198
    %v231 = vunpack.c.l.b16 %v199
    %v232 = vunpack.c.l.b16 %v200
    %v233 = vunpack.c.l.b16 %v201
    %v234 = vunpack.c.l.b16 %v202
    %v235 = vunpack.c.l.b16 %v203
    %v236 = vunpack.c.l.b16 %v204
    %v237 = vunpack.c.l.b16 %v205
    %v238 = vunpack.c.l.b16 %v206
    %v239 = vunpack.c.l.b16 %v207
    %v240 = vunpack.c.l.b16 %v208
    %v241 = vunpack.c.l.b16 %v209
    %v242 = vunpack.c.l.b16 %v210
    %v243 = vunpack.c.l.b16 %v211
    %v244 = vunpack.c.l.b16 %v212
    %v245 = vpack.c.b16 %v230, %v229
    %v246 = vpack.c.b16 %v232, %v231
    %v247 = vpack.c.b16 %v234, %v233
    %v248 = vpack.c.b16 %v236, %v235
    %v249 = vpack.c.b16 %v238, %v237
    %v250 = vpack.c.b16 %v240, %v239
    %v251 = vpack.c.b16 %v242, %v241
    %v252 = vpack.c.b16 %v244, %v243
    %261 = vmatprep.subr.bf16.mxu0 0
    %262 = vmatpush1.bf16.msra.mxu0 %v245
    %263 = vmatprep.subr.bf16.mxu0 0
    %264 = vmatpush1.bf16.msra.mxu0 %v246
    %265 = vmatprep.subr.bf16.mxu0 0
    %266 = vmatpush1.bf16.msra.mxu0 %v247
    %267 = vmatprep.subr.bf16.mxu0 0
    %268 = vmatpush1.bf16.msra.mxu0 %v248
    %269 = vmatprep.subr.bf16.mxu0 0
    %270 = vmatpush1.bf16.msra.mxu0 %v249
    %271 = vmatprep.subr.bf16.mxu0 0
    %272 = vmatpush1.bf16.msra.mxu0 %v250
    %273 = vmatprep.subr.bf16.mxu0 0
    %274 = vmatpush1.bf16.msra.mxu0 %v251
    %275 = vmatprep.subr.bf16.mxu0 0
    %276 = vmatpush1.bf16.msra.mxu0 %v252
    %277 = vmatprep.subr.bf16.mxu0 0
    %278 = vmatpush1.bf16.msra.mxu0 0
    %279 = vmatprep.subr.bf16.mxu0 0
    %280 = vmatpush1.bf16.msra.mxu0 0
    %281 = vmatprep.subr.bf16.mxu0 0
    %282 = vmatpush1.bf16.msra.mxu0 0
    %283 = vmatprep.subr.bf16.mxu0 0
    %284 = vmatpush1.bf16.msra.mxu0 0
    %285 = vmatprep.subr.bf16.mxu0 0
    %286 = vmatpush1.bf16.msra.mxu0 0
    %287 = vmatprep.subr.bf16.mxu0 0
    %288 = vmatpush1.bf16.msra.mxu0 0
    %289 = vmatprep.subr.bf16.mxu0 0
    %290 = vmatpush1.bf16.msra.mxu0 0
    %291 = vmatprep.subr.bf16.mxu0 0
    %292 = vmatpush1.bf16.msra.mxu0 0
    %293 = vmatprep.mubr.bf16.mxu0 0
    %294 = vmatmul.mubr.bf16.gmra.mrb[0].mxu0 %v196
    %v295 = vpop.f32.mrb[0].mxu0
    %v296 = vadd.f32 0.0, %v295
    %v297 = vpop.f32.mrb[0].mxu0
    %v298 = vpop.f32.mrb[0].mxu0
    %v299 = vadd.f32 0.0, %v298
    %v300 = vpop.f32.mrb[0].mxu0
    %301 = vdwg.mxu0
    %v302 = vadd.f32 %v194, %v296
    %v303 = vadd.f32 %v195, %v299
    %304 = vst [vmem:[#allocation8] sm:$0xff] %v302
    %305 = vst [vmem:[#allocation8 + $0x8] sm:$0xff] %v303
    // Predicated region
    $region38: #{tpu_custom_call.1} parent=1 // pred_check
      %p306 = pneg %p63
    $region39: #{tpu_custom_call.1} parent=1 // pred_check_branch
      %308 = sbr.rel (%p306) target = $region41
    $region40: #{tpu_custom_call.1} parent=1 // pred_region
      %v309 = vld [vmem:[#allocation8] sm:$0xff]
      %v310 = vld [vmem:[#allocation8 + $0x8] sm:$0xff]
      %v311 = vld [vmem:[%s4] sm:$0x1]
      %v313 = vlaneseq
      %v314 = vshrl.u32 %v313, 7
      %v315 = vsub.s32 0, %v314
      %v316 = vrot.slane %v311, %v315
      %v318 = vadd.f32 %v309, %v316
      %v319 = vadd.f32 %v310, %v316
      %320 = vst [vmem:[#allocation8] sm:$0xff] %v318
      %321 = vst [vmem:[#allocation8 + $0x8] sm:$0xff] %v319
    $region41: #{tpu_custom_call.1} parent=1 // pred_fallthru
      _
    // Predicated region
    $region42: #{tpu_custom_call.1} parent=1 // pred_check
      _
    $region43: #{tpu_custom_call.1} parent=1 // pred_check_branch
      %323 = sbr.rel (0) target = $region45
    $region44: #{tpu_custom_call.1} parent=1 // pred_region
      %s325 = ssub.s32 256, 256
      %326 = vsyncadd [#allocation4], %s325
      %s327 = sshll.u32 [#allocation8], 4
      %s328 = int_to_ptr.vmem [resolvable:$true] %s327
      %333 = dma.vmem_to_hbm [thread:$0]  %s328, 256, %s5, [#allocation4], 128, 128, 8
    $region45: #{tpu_custom_call.1} parent=1 // pred_fallthru
      _
    // Predicated region
    $region46: #{tpu_custom_call.1} parent=1 // pred_check
      _
    $region47: #{tpu_custom_call.1} parent=1 // pred_check_branch
      %335 = sbr.rel (0) target = $region49
    $region48: #{tpu_custom_call.1} parent=1 // pred_region
      %336 = dma.done [#allocation4], 256
    $region49: #{tpu_custom_call.1} parent=1 // pred_fallthru
      _
    %337 = vsyncpa [#allocation3], 1
    %338 = vsyncpa [#allocation6], 1
    %339 = vsyncpa [#allocation4], 1

</llo_original>
